<compile_context>
chip_gen: v7x
topology: tpu7x:2x2x1
jax: 0.10.0
libtpu: 0.0.40
codegen_flags: <defaults>
</compile_context>

<pallas_src>
import jax
import jax.numpy as jnp
from jax.experimental import pallas as pl
from jax.experimental.pallas import tpu as pltpu


def _pick_tile(s, cap=512):
    """Largest tile <= cap that evenly divides s and is a multiple of 8
    (or s itself when s <= cap)."""
    if s <= cap:
        return s
    for t in range(cap - (cap % 8), 7, -8):
        if s % t == 0:
            return t
    # TODO(synk): no multiple-of-8 divisor <= cap -> fall back to a single
    # whole-channel block (rare odd shapes; correct but larger VMEM tile).
    return s


def _max_kernel(x_ref, gmax_ref):
    """Global max accumulator: gmax_ref is the same (1,1) block every step."""
    first = (pl.program_id(0) == 0) & (pl.program_id(1) == 0)

    @pl.when(first)
    def _():
        gmax_ref[...] = jnp.full((1, 1), -jnp.inf, jnp.float32)

    gmax_ref[...] = jnp.maximum(gmax_ref[...], jnp.max(x_ref[...]))


def _brightness_kernel(factors_ref, gmax_ref, x_ref, o_ref):
    """out = clamp(f_c * x, 0, 1), or pass-through if the global max is 0."""
    c = pl.program_id(0)
    f = factors_ref[c]                      # per-channel factor from SMEM
    x = x_ref[...]
    adj = jnp.clip(x * f, 0.0, 1.0)
    # emulates `if img.max() == 0: return img`
    o_ref[...] = jnp.where(gmax_ref[0, 0] == 0.0, x, adj)


def change_brightness(img, key, p=0.2):
    """JAX/Pallas port of Change_brightness.forward.

    img: (C, H, W) float array.  Returns a new (C, H, W) float32 array.
    """
    img = img.astype(jnp.float32)
    C, H, W = img.shape

    # factor = max(N(1, p), 0.5) per channel; keep traced (no host sync)
    factors = jnp.maximum(
        1.0 + p * jax.random.normal(key, (C,), dtype=jnp.float32), 0.5)

    # lane-dense view: last dim = 128 whenever the spatial size allows it
    n = H * W
    if n % 128 == 0:
        view = img.reshape(C, n // 128, 128)
    else:
        view = img                                   # (C, H, W); W = full dim
    _, S, L = view.shape
    tile = _pick_tile(S)
    grid = (C, S // tile)

    block = pl.BlockSpec((1, tile, L), lambda c, s: (c, s, 0))

    # --- pass 1: global max (gates the whole op) ---------------------------
    gmax = pl.pallas_call(
        _max_kernel,
        out_shape=jax.ShapeDtypeStruct((1, 1), jnp.float32),
        grid=grid,
        in_specs=[block],
        out_specs=pl.BlockSpec((1, 1), lambda c, s: (0, 0)),
        compiler_params=pltpu.CompilerParams(
            dimension_semantics=("arbitrary", "arbitrary")),
    )(view)

    # --- pass 2: per-channel brightness adjust -----------------------------
    out_view = pl.pallas_call(
        _brightness_kernel,
        out_shape=jax.ShapeDtypeStruct(view.shape, jnp.float32),
        grid=grid,
        in_specs=[
            pl.BlockSpec(memory_space=pltpu.SMEM),   # factors (C,)
            pl.BlockSpec(memory_space=pltpu.SMEM),   # gmax (1, 1)
            block,                                   # image tiles
        ],
        out_specs=block,
        compiler_params=pltpu.CompilerParams(
            dimension_semantics=("parallel", "parallel")),
    )(factors, gmax, view)

    return out_view.reshape(C, H, W)


if __name__ == "__main__":
    key = jax.random.PRNGKey(0)
    k_img, k_fac = jax.random.split(key)

    C, H, W = 4, 16, 16
    img = jax.random.uniform(k_img, (C, H, W), dtype=jnp.float32)   # in [0,1]

    out = change_brightness(img, k_fac, p=0.2)
    out = jax.block_until_ready(out)

    assert out.shape == (C, H, W)
    assert out.dtype == jnp.float32

    # pure-JAX reference
    factors = jnp.maximum(
        1.0 + 0.2 * jax.random.normal(k_fac, (C,), dtype=jnp.float32), 0.5)
    ref = jnp.where(jnp.max(img) == 0.0, img,
                    jnp.clip(img * factors[:, None, None], 0.0, 1.0))
    assert bool(jnp.allclose(out, ref, atol=1e-6))

    # the `img.max() == 0` gate: non-positive image must pass through untouched
    neg = -jnp.abs(jax.random.uniform(k_img, (C, H, W), dtype=jnp.float32))
    neg = neg.at[0, 0, 0].set(0.0)                    # max is exactly 0
    out_neg = jax.block_until_ready(change_brightness(neg, k_fac, p=0.2))
    assert bool(jnp.allclose(out_neg, neg))

    print("KERNEL_OK")
</pallas_src>

<mosaic_0001>
module attributes {stable_mosaic.version = 11 : i64} {
  func.func @_max_kernel(%arg0: i32, %arg1: i32, %arg2: memref<1x2x128xf32, #tpu.memory_space<vmem>>, %arg3: memref<1x1xf32, #tpu.memory_space<vmem>>) attributes {dimension_semantics = [#tpu.dimension_semantics<arbitrary>, #tpu.dimension_semantics<arbitrary>], iteration_bounds = array<i64: 4, 1>, scalar_prefetch = 0 : i64, scratch_operands = 0 : i64, tpu.core_type = #tpu.core_type<tc>, window_params = [{transform_indices = @transform_0, window_bounds = array<i64: 1, 2, 128>}, {pipeline_mode = #tpu.pipeline_mode<synchronous>, transform_indices = @transform_1, window_bounds = array<i64: 1, 1>}]} {
    %c0_i32 = arith.constant 0 : i32
    %0 = arith.cmpi eq, %arg0, %c0_i32 : i32
    %c0_i32_0 = arith.constant 0 : i32
    %1 = arith.cmpi eq, %arg1, %c0_i32_0 : i32
    %2 = arith.andi %0, %1 : i1
    %3 = arith.extui %2 : i1 to i32
    %c0_i32_1 = arith.constant 0 : i32
    %4 = arith.cmpi ne, %3, %c0_i32_1 : i32
    scf.if %4 {
      %cst_8 = arith.constant 0xFF800000 : f32
      %14 = vector.broadcast %cst_8 : f32 to vector<1x1xf32>
      %c0_9 = arith.constant 0 : index
      %c0_10 = arith.constant 0 : index
      %15 = vector.load %arg3[%c0_9, %c0_10] : memref<1x1xf32, #tpu.memory_space<vmem>>, vector<1x1xf32>
      tpu.vector_store %arg3[%c0_9, %c0_10], %14 {strides = array<i32>} : memref<1x1xf32, #tpu.memory_space<vmem>>, vector<1x1xf32>,
    } else {
    }
    %c0 = arith.constant 0 : index
    %c0_2 = arith.constant 0 : index
    %5 = vector.load %arg3[%c0, %c0_2] : memref<1x1xf32, #tpu.memory_space<vmem>>, vector<1x1xf32>
    %c0_3 = arith.constant 0 : index
    %c0_4 = arith.constant 0 : index
    %c0_5 = arith.constant 0 : index
    %6 = vector.load %arg2[%c0_3, %c0_4, %c0_5] : memref<1x2x128xf32, #tpu.memory_space<vmem>>, vector<1x2x128xf32>
    %7 = vector.shape_cast %6 : vector<1x2x128xf32> to vector<1x1x2x128xf32>
    %cst = arith.constant dense<0xFF800000> : vector<1xf32>
    %8 = vector.multi_reduction <maximumf>, %7, %cst [1, 2, 3] : vector<1x1x2x128xf32> to vector<1xf32>
    %9 = vector.shape_cast %8 : vector<1xf32> to vector<1x1x1x1xf32>
    %10 = vector.extract %9[0, 0, 0, 0] : f32 from vector<1x1x1x1xf32>
    %11 = vector.broadcast %10 : f32 to vector<1x1xf32>
    %12 = arith.maximumf %5, %11 : vector<1x1xf32>
    %c0_6 = arith.constant 0 : index
    %c0_7 = arith.constant 0 : index
    %13 = vector.load %arg3[%c0_6, %c0_7] : memref<1x1xf32, #tpu.memory_space<vmem>>, vector<1x1xf32>
    tpu.vector_store %arg3[%c0_6, %c0_7], %12 {strides = array<i32>} : memref<1x1xf32, #tpu.memory_space<vmem>>, vector<1x1xf32>,
    return
  }
  func.func @transform_0(%arg0: i32, %arg1: i32) -> (i32, i32, i32) {
    %c0_i32 = arith.constant 0 : i32
    %c0_i32_0 = arith.constant 0 : i32
    return %arg0, %arg1, %c0_i32 : i32, i32, i32
  }
  func.func @transform_1(%arg0: i32, %arg1: i32) -> (i32, i32) {
    %c0_i32 = arith.constant 0 : i32
    %c0_i32_0 = arith.constant 0 : i32
    %c0_i32_1 = arith.constant 0 : i32
    return %c0_i32, %c0_i32_0 : i32, i32
  }
}

</mosaic_0001>

<llo_original>
// kernel: tpu_custom_call.1
$region0: #{tpu_custom_call.1}
  #allocation0 [shape = 'u32[]', space=smem, size = 0x4, offset = 0x4, fixed_abs, tag = 'smem constant byte address 0x4 - core index']
  #allocation1 [shape = 'u32[144,128]{1,0:T(1,128)}', space=vmem, size = 0x12000, scoped, tag = 'internal scratch']
  %s0 = inlined_call_operand.hbm [shape: f32[4,2,128], index: 0, kind: input, shape index: {}]
  %s1 = inlined_call_operand.hbm [shape: f32[1,1], index: 1, kind: output, shape index: {}]
  %s2 = sld [smem:[#allocation0]]
  $region45: #{tpu_custom_call.1} parent=0
    _
  %s4 = ssub.s32 1, %s2
  %s5 = scalar_select 0, %s4, %s2
  $region1: #{tpu_custom_call.1} parent=0
    #allocation2 [shape = 'u8[2048]{0}', space=vmem, size = 0x800, scoped, tag = 'input window, operand 0']
    #allocation3 [shape = 's32[2]{0}', space=sflag, size = 0x8, scoped, tag = 'scoped memory for tpu_custom_call.1']
    #allocation4 [shape = 's32[2]{0}', space=sflag, size = 0x8, scoped, tag = 'scoped memory for tpu_custom_call.1']
    #allocation5 [shape = 'u8[512]{0}', space=vmem, size = 0x400, scoped, tag = 'output window, operand 0, single buffered']
    %6 = vsyncpa [#allocation3], 0
    %s7 = scalar_lea.sflag [#allocation3], 1
    %8 = vsyncpa %s7, 0
    %9 = vsyncpa [#allocation4], 0
    loop: start=0, step=1, limit=6
    $region2: #{tpu_custom_call.1} parent=1 // loop_pre_header
      _
    $region3: #{tpu_custom_call.1} parent=1 // loop_header
      %s11 = sphi 0, %s15
      %p12 = scmp.ge.s32.totalorder %s11, 6
      %s18 = sphi 0, %s30
      %s19 = sphi 0, %s26
      %s20 = sphi 0, %s18
      %s21 = sphi 0, %s19
      %s22 = sphi 0, %s20
      %s23 = sphi 0, %s21
      %s35 = sphi 0, %s37
      %s38 = sphi 0, %s35
      %s39 = sphi 0, %s38
      %s55 = sphi 0, %s39
      %s59 = sphi 0, %s59
      %s61 = sphi 0, %s59
      %s62 = sphi 0, %s61
      %s76 = sphi 0, %s62
    $region4: #{tpu_custom_call.1} parent=1 // loop_header_branch
      %14 = sbr.rel (%p12) target = $region8
    $region5: #{tpu_custom_call.1} parent=1 // loop_body
      %s16 = ssub.s32 %s11, 1
      %s17 = ssub.s32 %s11, 2
      %s24 = sadd.s32 1, %s19
      %p25 = scmp.ge.s32.totalorder %s24, 1
      %s26 = scalar_select %p25, 0, %s24
      %s27 = sadd.s32 1, %s18
      %s28 = scalar_select %p25, %s27, %s18
      %p29 = scmp.ge.s32.totalorder %s28, 4
      %s30 = scalar_select %p29, 0, %s28
      %s31 = ssub.s32 %s18, %s30
      %s32 = ssub.s32 %s19, %s26
      %s33 = sor.u32 %s31, %s32
      %p34 = scmp.eq.s32.totalorder %s33, 0
      %s36 = sadd.s32 %s35, 1
      %s37 = scalar_select %p34, %s35, %s36
      %p40 = pneg %p34
      %p41 = scmp.eq.s32.totalorder %s11, 3
      %p42 = por %p40, %p41
      %p43 = scmp.ne.s32.totalorder %s35, %s38
      %p44 = scmp.eq.s32.totalorder %s11, 0
      %p45 = por %p43, %p44
      %p46 = scmp.ne.s32.totalorder %s35, %s38
      %p47 = scmp.eq.s32.totalorder %s16, 3
      %p48 = por %p46, %p47
      %p49 = scmp.ne.s32.totalorder %s38, %s39
      %p50 = scmp.eq.s32.totalorder %s16, 0
      %p51 = por %p49, %p50
      %p52 = scmp.ne.s32.totalorder %s38, %s39
      %p53 = scmp.eq.s32.totalorder %s17, 3
      %p54 = por %p52, %p53
      %p56 = scmp.ne.s32.totalorder %s39, %s55
      %p57 = scmp.eq.s32.totalorder %s17, 0
      %p58 = por %p56, %p57
      %s60 = sadd.s32 %s59, 1
      %p63 = scmp.eq.s32.totalorder %s11, 3
      %p64 = scmp.ne.s32.totalorder %s59, %s61
      %p65 = scmp.eq.s32.totalorder %s11, 0
      %p66 = por %p64, %p65
      %p67 = scmp.ne.s32.totalorder %s59, %s61
      %p68 = scmp.eq.s32.totalorder %s16, 3
      %p69 = por %p67, %p68
      %p70 = scmp.ne.s32.totalorder %s61, %s62
      %p71 = scmp.eq.s32.totalorder %s16, 0
      %p72 = por %p70, %p71
      %p73 = scmp.ne.s32.totalorder %s61, %s62
      %p74 = scmp.eq.s32.totalorder %s17, 3
      %p75 = por %p73, %p74
      %p77 = scmp.ne.s32.totalorder %s62, %s76
      %p78 = scmp.eq.s32.totalorder %s17, 0
      %p79 = por %p77, %p78
      %p80 = scmp.le.s32.totalorder 1, %s11
      %p81 = scmp.lt.s32.totalorder %s11, 5
      %p82 = pnand %p80, %p81
      %p83 = pneg %p82
      // Predicated region
      $region9: #{tpu_custom_call.1} parent=5 // pred_check
        _
      $region10: #{tpu_custom_call.1} parent=5 // pred_check_branch
        %85 = sbr.rel (%p82) target = $region12
      $region11: #{tpu_custom_call.1} parent=5 // pred_region
        %s86 = ssub.s32 %s11, 1
      $region12: #{tpu_custom_call.1} parent=5 // pred_fallthru
        _
      %p87 = scmp.lt.s32.totalorder %s11, 4
      // Predicated region
      $region13: #{tpu_custom_call.1} parent=5 // pred_check
        %p88 = pneg %p87
      $region14: #{tpu_custom_call.1} parent=5 // pred_check_branch
        %90 = sbr.rel (%p88) target = $region16
      $region15: #{tpu_custom_call.1} parent=5 // pred_region
        // Predicated region
        $region17: #{tpu_custom_call.1} parent=15 // pred_check
          %p91 = pneg %p45
        $region18: #{tpu_custom_call.1} parent=15 // pred_check_branch
          %93 = sbr.rel (%p91) target = $region20
        $region19: #{tpu_custom_call.1} parent=15 // pred_region
          %s94 = sand.u32 %s35, 1
          %s95 = scalar_lea.sflag [#allocation3], %s94
          %s96 = sand.u32 %s35, 1
          %s97 = smul.addr %s96, 2
          %s98 = scalar_lea.vmem [#allocation2], %s97
          %s100 = ssub.s32 32, 32
          %101 = vsyncadd %s95, %s100
          %s102 = sadd.s32 %s19, %s18
          %s103 = smul.addr %s102, 32
          %s104 = scalar_lea.hbm %s0, %s103
          %s106 = sshll.u32 %s98, 4
          %s107 = int_to_ptr.vmem [resolvable:$true] %s106
          %109 = dma.hbm_to_vmem [thread:$0]  %s104, 32, %s107, %s95
        $region20: #{tpu_custom_call.1} parent=15 // pred_fallthru
          _
      $region16: #{tpu_custom_call.1} parent=5 // pred_fallthru
        _
      %p110 = scmp.le.s32.totalorder 1, %s11
      %p111 = scmp.lt.s32.totalorder %s11, 5
      %p112 = pnand %p110, %p111
      %p113 = pneg %p112
      // Predicated region
      $region21: #{tpu_custom_call.1} parent=5 // pred_check
        _
      $region22: #{tpu_custom_call.1} parent=5 // pred_check_branch
        %115 = sbr.rel (%p112) target = $region24
      $region23: #{tpu_custom_call.1} parent=5 // pred_region
        %s116 = ssub.s32 %s11, 1
        %s117 = sand.u32 %s38, 1
        %s118 = scalar_lea.sflag [#allocation3], %s117
        %s119 = sand.u32 %s38, 1
        %s120 = smul.addr %s119, 2
        %s121 = scalar_lea.vmem [#allocation2], %s120
        // Predicated region
        $region25: #{tpu_custom_call.1} parent=23 // pred_check
          %p122 = pneg %p51
        $region26: #{tpu_custom_call.1} parent=23 // pred_check_branch
          %124 = sbr.rel (%p122) target = $region28
        $region27: #{tpu_custom_call.1} parent=23 // pred_region
          %125 = dma.done %s118, 32
        $region28: #{tpu_custom_call.1} parent=23 // pred_fallthru
          _
        %s126 = sand.u32 %s38, 1
        %s127 = scalar_lea.sflag [#allocation3], %s126
        %s128 = sand.u32 %s38, 1
        %s129 = smul.addr %s128, 2
        %s130 = scalar_lea.vmem [#allocation2], %s129
        %p131 = pneg %p51
        %p132 = pneg %p48
        %p133 = pneg %p72
        %p134 = pneg %p69
        %p135 = scmp.eq.s32.totalorder %s20, 0
        %p136 = scmp.eq.s32.totalorder %s21, 0
        %p137 = pnand %p135, %p136
        %p138 = pneg %p137
        // Predicated region
        $region29: #{tpu_custom_call.1} parent=23 // pred_check
          _
        $region30: #{tpu_custom_call.1} parent=23 // pred_check_branch
          %140 = sbr.rel (%p137) target = $region32
        $region31: #{tpu_custom_call.1} parent=23 // pred_region
          %vm141 = vcmask 0
          %142 = vst.msk [vmem:[#allocation5] sm:$0x1] %vm141, -inf
        $region32: #{tpu_custom_call.1} parent=23 // pred_fallthru
          _
        %v143 = vld [vmem:[#allocation5] sm:$0x1]
        %v144 = vld [vmem:[%s121] sm:$0x3]
        %vm145 = vcmask 1041408
        %v146 = vsel %vm145, %v144, -inf
        %147 = vmax.xlane.f32.xlu0 %v146
        %v148 = vpop.xlane.xlu0 %147
        %v149 = vrot.slane %v148, 4
        %v150 = vmax.f32 %v148, %v149
        %v151 = vrot.slane %v150, 2
        %v152 = vmax.f32 %v150, %v151
        %v153 = vrot.slane %v152, 1
        %v154 = vmax.f32 %v152, %v153
        %s155 = vtos %v154
        %v156 = vstv %s155
        %v157 = vmax.f32 %v143, %v156
        %vm158 = vcmask 0
        %159 = vst.msk [vmem:[#allocation5] sm:$0x1] %vm158, %v157
        // Predicated region
        $region33: #{tpu_custom_call.1} parent=23 // pred_check
          %p160 = pneg %p69
        $region34: #{tpu_custom_call.1} parent=23 // pred_check_branch
          %162 = sbr.rel (%p160) target = $region36
        $region35: #{tpu_custom_call.1} parent=23 // pred_region
          %s164 = ssub.s32 16, 16
          %165 = vsyncadd [#allocation4], %s164
          %s167 = sshll.u32 [#allocation5], 4
          %s168 = int_to_ptr.vmem [resolvable:$true] %s167
          %170 = dma.vmem_to_hbm [thread:$0]  %s168, 16, %s1, [#allocation4]
        $region36: #{tpu_custom_call.1} parent=23 // pred_fallthru
          _
        // Predicated region
        $region37: #{tpu_custom_call.1} parent=23 // pred_check
          %p171 = pneg %p69
        $region38: #{tpu_custom_call.1} parent=23 // pred_check_branch
          %173 = sbr.rel (%p171) target = $region40
        $region39: #{tpu_custom_call.1} parent=23 // pred_region
          %174 = dma.done [#allocation4], 16
        $region40: #{tpu_custom_call.1} parent=23 // pred_fallthru
          _
      $region24: #{tpu_custom_call.1} parent=5 // pred_fallthru
        _
      %p175 = scmp.le.s32.totalorder 2, %s11
      // Predicated region
      $region41: #{tpu_custom_call.1} parent=5 // pred_check
        %p176 = pneg %p175
      $region42: #{tpu_custom_call.1} parent=5 // pred_check_branch
        %178 = sbr.rel (%p176) target = $region44
      $region43: #{tpu_custom_call.1} parent=5 // pred_region
        %s179 = ssub.s32 %s11, 2
      $region44: #{tpu_custom_call.1} parent=5 // pred_fallthru
        _
    $region6: #{tpu_custom_call.1} parent=1 // loop_footer
      %s15 = sadd.s32 1, %s11
    $region7: #{tpu_custom_call.1} parent=1 // loop_footer_branch
      %10 = sbr.rel target = $region3
    $region8: #{tpu_custom_call.1} parent=1 // loop_exit
      _
    %180 = vsyncpa [#allocation3], 1
    %s181 = scalar_lea.sflag [#allocation3], 1
    %182 = vsyncpa %s181, 1
    %183 = vsyncpa [#allocation4], 1
    %s184 = scalar_lea.sflag [#allocation4], 1
    %185 = vsyncpa %s184, 1

</llo_original>
